<compile_context>
chip_gen: v7x
topology: tpu7x:2x2x1
jax: 0.10.0
libtpu: 0.0.40
codegen_flags: <defaults>
</compile_context>

<pallas_src>
import functools

import jax
import jax.numpy as jnp
import numpy as np
from jax.experimental import pallas as pl
from jax.experimental.pallas import tpu as pltpu


def _dice_loss_kernel(logits_ref, tgt_ref, w_ref, sum_ref, *, alpha, n_rows):
    i = pl.program_id(0)

    logits = logits_ref[...].astype(jnp.float32)          # (TN, C)
    tgt = tgt_ref[...]                                    # (TN, 1) int32, pre-remapped
    w_t = w_ref[...]                                      # (TN, 1) f32, 0 where ignored
    tn, c = logits.shape

    # Row validity: grid is cdiv(N, TN); the last tile may read garbage rows
    # past N.  A select (not a multiply) keeps any NaN/Inf garbage out of the
    # reduction.
    row = jax.lax.broadcasted_iota(jnp.int32, (tn, 1), 0) + i * tn
    row_valid = row < n_rows                              # (TN, 1) bool

    # Shared shifted operand x = logits - m, reused by the target-logit gather
    # and the logsumexp (one fewer live (TN, C) f32 temporary).
    m = jnp.max(logits, axis=-1, keepdims=True)           # (TN, 1)
    x = logits - m                                        # (TN, C), <= 0

    # Masked-select "gather" of the target's shifted logit (no float one-hot).
    col = jax.lax.broadcasted_iota(jnp.int32, (tn, c), 1)
    hit = col == tgt                                      # (TN, C) bool
    x_t = jnp.max(jnp.where(hit, x, -jnp.inf), axis=-1, keepdims=True)  # (TN, 1)

    # log p_t directly via log-sum-exp (skips the softmax divide; stable).
    logz = jnp.log(jnp.sum(jnp.exp(x), axis=-1, keepdims=True))         # (TN, 1)
    log_p = x_t - logz                                    # <= 0
    p_t = jnp.exp(log_p)                                  # in (0, 1]

    if alpha == 1.0:
        factor = 1.0 - p_t
    else:
        factor = (1.0 - p_t) ** alpha

    loss = -1.0 * w_t * factor * log_p                    # (TN, 1)
    loss = jnp.where(row_valid, loss, 0.0)                # select, not *mask

    # Single lane-dense per-tile partial; final reduce + divide in the wrapper.
    sum_ref[...] = jnp.full(sum_ref.shape, jnp.sum(loss), jnp.float32)


def _pick_block_n(n, c, itemsize):
    """Byte-based row-tile picker: ~2 MiB of logits per tile.

    With double-buffered inputs plus ~5 live (TN, C) f32 temporaries the VMEM
    working set is ~12-14x the input tile bytes (~28 MiB for a 2 MiB bf16
    tile), which fits under the 40 MiB vmem limit requested below on every
    generation while amortizing the ~0.35 us fixed per-grid-step overhead.
    """
    target_bytes = 2 << 20
    bn = target_bytes // max(1, c * itemsize)
    bn = max(8, (bn // 8) * 8)
    n_up = ((n + 7) // 8) * 8
    return max(8, min(bn, n_up))


def self_adj_dice_loss(logits, targets, wt, *, alpha=1.0, ignore_index=-100,
                       block_n=None, reduction="mean"):
    """Pallas implementation of SelfAdjDiceLoss forward (reduction='mean'/'sum')."""
    n, c = logits.shape
    assert c > 2, "ignore_index remap to class 2 requires C > 2 (as in the module)"

    # --- cheap (N,)-sized preprocessing in the wrapper (off the kernel's
    #     VALU-limited inner loop) --------------------------------------------
    targets = targets.astype(jnp.int32)
    active = targets != ignore_index
    tgt = jnp.where(active, targets, 2)                    # module remaps ignored -> 2
    w_eff = jnp.where(active, wt.astype(jnp.float32)[tgt], 0.0)
    count = jnp.sum(active.astype(jnp.float32))

    tgt2d = tgt.reshape(n, 1)
    w2d = w_eff.reshape(n, 1)

    # --- tiling ---------------------------------------------------------------
    if block_n is None:
        block_n = _pick_block_n(n, c, jnp.dtype(logits.dtype).itemsize)
    block_n = max(8, (int(block_n) + 7) // 8 * 8)
    block_n = min(block_n, ((n + 7) // 8) * 8)
    num_tiles = int(pl.cdiv(n, block_n))

    kernel = functools.partial(_dice_loss_kernel, alpha=alpha, n_rows=n)

    sums = pl.pallas_call(
        kernel,
        out_shape=jax.ShapeDtypeStruct((num_tiles, 8, 128), jnp.float32),
        grid_spec=pltpu.PrefetchScalarGridSpec(
            num_scalar_prefetch=0,
            grid=(num_tiles,),
            in_specs=[
                pl.BlockSpec((block_n, c), lambda i: (i, 0)),   # logits tile
                pl.BlockSpec((block_n, 1), lambda i: (i, 0)),   # remapped targets
                pl.BlockSpec((block_n, 1), lambda i: (i, 0)),   # gathered class weights
            ],
            out_specs=pl.BlockSpec((1, 8, 128), lambda i: (i, 0, 0)),  # per-tile sum
        ),
        # Independent per-tile outputs, no cross-step carry -> the grid axis is
        # "parallel" (shards across both TensorCores on v7x).
        compiler_params=pltpu.CompilerParams(
            dimension_semantics=("parallel",),
            vmem_limit_bytes=40 * 1024 * 1024,
        ),
    )(logits, tgt2d, w2d)

    total = jnp.sum(sums[:, 0, 0])
    if reduction == "sum":
        return total
    # 'mean': NaN when every row is ignore_index (count == 0), matching the
    # naive PyTorch reference behaviour.
    # TODO(synk): reduction='none' (per-row loss output) not implemented.
    return total / count


def _reference(logits, targets, wt, alpha=1.0, ignore_index=-100):
    """Pure-JAX reference mirroring the PyTorch forward (reduction='mean')."""
    active = targets != ignore_index
    mask = active.astype(jnp.float32)
    tgt = jnp.where(active, targets, 2)
    probs = jax.nn.softmax(logits.astype(jnp.float32), axis=-1)
    p_t = jnp.take_along_axis(probs, tgt[:, None], axis=-1)[:, 0]
    w_t = wt[tgt]
    loss = -1.0 * w_t * ((1.0 - p_t) ** alpha) * jnp.log(p_t) * mask
    return loss.sum() / mask.sum()


if __name__ == "__main__":
    key = jax.random.PRNGKey(0)
    k_logits, k_targets = jax.random.split(key)

    # Small shapes consistent with (N, C) logits / (N,) targets.
    N, C = 24, 32
    # bf16 logits in HBM (kernel upcasts internally) — halves HBM traffic.
    logits = jax.random.normal(k_logits, (N, C), dtype=jnp.float32).astype(jnp.bfloat16)
    targets = jax.random.randint(k_targets, (N,), 0, C, dtype=jnp.int32)
    # exercise the ignore_index path in both tiles
    targets = targets.at[3].set(-100)
    targets = targets.at[17].set(-100)

    # deterministic per-class weights (module's `wt` parameter, shape (C,))
    wt = 0.5 + 0.1 * jnp.arange(C, dtype=jnp.float32)

    # block_n=16 with N=24 exercises the multi-tile grid and the partial-tile
    # row mask (last block covers rows 16..31, rows 24..31 are padding).
    out = self_adj_dice_loss(logits, targets, wt, alpha=1.0, block_n=16)
    out = jax.block_until_ready(out)

    ref = _reference(logits, targets, wt, alpha=1.0)
    assert np.abs(np.asarray(out) - np.asarray(ref)) < 1e-4, (out, ref)

    print("KERNEL_OK")
</pallas_src>

<mosaic_0001>
module attributes {stable_mosaic.version = 11 : i64} {
  func.func @_dice_loss_kernel(%arg0: i32, %arg1: memref<16x32xbf16, #tpu.memory_space<vmem>>, %arg2: memref<16x1xi32, #tpu.memory_space<vmem>>, %arg3: memref<16x1xf32, #tpu.memory_space<vmem>>, %arg4: memref<1x8x128xf32, #tpu.memory_space<vmem>>) attributes {dimension_semantics = [#tpu.dimension_semantics<parallel>], iteration_bounds = array<i64: 2>, scalar_prefetch = 0 : i64, scratch_operands = 0 : i64, tpu.core_type = #tpu.core_type<tc>, window_params = [{transform_indices = @transform_0, window_bounds = array<i64: 16, 32>}, {transform_indices = @transform_1, window_bounds = array<i64: 16, 1>}, {transform_indices = @transform_2, window_bounds = array<i64: 16, 1>}, {transform_indices = @transform_3, window_bounds = array<i64: 1, 8, 128>}]} {
    %c0 = arith.constant 0 : index
    %c0_0 = arith.constant 0 : index
    %0 = vector.load %arg1[%c0, %c0_0] : memref<16x32xbf16, #tpu.memory_space<vmem>>, vector<16x32xbf16>
    %1 = arith.extf %0 : vector<16x32xbf16> to vector<16x32xf32>
    %c0_1 = arith.constant 0 : index
    %c0_2 = arith.constant 0 : index
    %2 = vector.load %arg2[%c0_1, %c0_2] : memref<16x1xi32, #tpu.memory_space<vmem>>, vector<16x1xi32>
    %c0_3 = arith.constant 0 : index
    %c0_4 = arith.constant 0 : index
    %3 = vector.load %arg3[%c0_3, %c0_4] : memref<16x1xf32, #tpu.memory_space<vmem>>, vector<16x1xf32>
    %4 = tpu.iota {dimensions = array<i32: 0>} : vector<16x1xi32>
    %c16_i32 = arith.constant 16 : i32
    %5 = arith.muli %arg0, %c16_i32 : i32
    %6 = vector.broadcast %5 : i32 to vector<16x1xi32>
    %7 = arith.addi %4, %6 : vector<16x1xi32>
    %c24_i32 = arith.constant 24 : i32
    %8 = vector.broadcast %c24_i32 : i32 to vector<16x1xi32>
    %9 = arith.cmpi slt, %7, %8 : vector<16x1xi32>
    %cst = arith.constant dense<0xFF800000> : vector<16xf32>
    %10 = vector.multi_reduction <maximumf>, %1, %cst [1] : vector<16x32xf32> to vector<16xf32>
    %11 = vector.shape_cast %10 : vector<16xf32> to vector<16x1xf32>
    %12 = vector.broadcast %11 : vector<16x1xf32> to vector<16x32xf32>
    %13 = arith.subf %1, %12 : vector<16x32xf32>
    %14 = tpu.iota {dimensions = array<i32: 1>} : vector<16x32xi32>
    %15 = vector.broadcast %2 : vector<16x1xi32> to vector<16x32xi32>
    %16 = arith.cmpi eq, %14, %15 : vector<16x32xi32>
    %cst_5 = arith.constant 0xFF800000 : f32
    %17 = vector.broadcast %cst_5 : f32 to vector<16x32xf32>
    %18 = arith.select %16, %13, %17 : vector<16x32xi1>, vector<16x32xf32>
    %cst_6 = arith.constant dense<0xFF800000> : vector<16xf32>
    %19 = vector.multi_reduction <maximumf>, %18, %cst_6 [1] : vector<16x32xf32> to vector<16xf32>
    %20 = vector.shape_cast %19 : vector<16xf32> to vector<16x1xf32>
    %21 = math.exp %13 : vector<16x32xf32>
    %cst_7 = arith.constant dense<0.000000e+00> : vector<16xf32>
    %22 = vector.multi_reduction <add>, %21, %cst_7 [1] : vector<16x32xf32> to vector<16xf32>
    %23 = vector.shape_cast %22 : vector<16xf32> to vector<16x1xf32>
    %24 = math.log %23 : vector<16x1xf32>
    %25 = arith.subf %20, %24 : vector<16x1xf32>
    %26 = math.exp %25 : vector<16x1xf32>
    %cst_8 = arith.constant 1.000000e+00 : f32
    %27 = vector.broadcast %cst_8 : f32 to vector<16x1xf32>
    %28 = arith.subf %27, %26 : vector<16x1xf32>
    %cst_9 = arith.constant -1.000000e+00 : f32
    %29 = vector.broadcast %cst_9 : f32 to vector<16x1xf32>
    %30 = arith.mulf %29, %3 : vector<16x1xf32>
    %31 = arith.mulf %30, %28 : vector<16x1xf32>
    %32 = arith.mulf %31, %25 : vector<16x1xf32>
    %cst_10 = arith.constant 0.000000e+00 : f32
    %33 = vector.broadcast %cst_10 : f32 to vector<16x1xf32>
    %34 = arith.select %9, %32, %33 : vector<16x1xi1>, vector<16x1xf32>
    %35 = vector.shape_cast %34 : vector<16x1xf32> to vector<1x16x1xf32>
    %cst_11 = arith.constant dense<0.000000e+00> : vector<1xf32>
    %36 = vector.multi_reduction <add>, %35, %cst_11 [1, 2] : vector<1x16x1xf32> to vector<1xf32>
    %37 = vector.shape_cast %36 : vector<1xf32> to vector<1x1x1xf32>
    %38 = vector.extract %37[0, 0, 0] : f32 from vector<1x1x1xf32>
    %39 = vector.broadcast %38 : f32 to vector<1x8x128xf32>
    %c0_12 = arith.constant 0 : index
    %c0_13 = arith.constant 0 : index
    %c0_14 = arith.constant 0 : index
    %40 = vector.load %arg4[%c0_12, %c0_13, %c0_14] : memref<1x8x128xf32, #tpu.memory_space<vmem>>, vector<1x8x128xf32>
    tpu.vector_store %arg4[%c0_12, %c0_13, %c0_14], %39 {strides = array<i32>} : memref<1x8x128xf32, #tpu.memory_space<vmem>>, vector<1x8x128xf32>,
    return
  }
  func.func @transform_0(%arg0: i32) -> (i32, i32) {
    %c0_i32 = arith.constant 0 : i32
    %c0_i32_0 = arith.constant 0 : i32
    return %arg0, %c0_i32 : i32, i32
  }
  func.func @transform_1(%arg0: i32) -> (i32, i32) {
    %c0_i32 = arith.constant 0 : i32
    %c0_i32_0 = arith.constant 0 : i32
    return %arg0, %c0_i32 : i32, i32
  }
  func.func @transform_2(%arg0: i32) -> (i32, i32) {
    %c0_i32 = arith.constant 0 : i32
    %c0_i32_0 = arith.constant 0 : i32
    return %arg0, %c0_i32 : i32, i32
  }
  func.func @transform_3(%arg0: i32) -> (i32, i32, i32) {
    %c0_i32 = arith.constant 0 : i32
    %c0_i32_0 = arith.constant 0 : i32
    %c0_i32_1 = arith.constant 0 : i32
    return %arg0, %c0_i32, %c0_i32_0 : i32, i32, i32
  }
}

</mosaic_0001>

<llo_original>
// kernel: tpu_custom_call.1
$region0: #{tpu_custom_call.1}
  #allocation0 [shape = 'u32[]', space=smem, size = 0x4, offset = 0x4, fixed_abs, tag = 'smem constant byte address 0x4 - core index']
  #allocation1 [shape = 'u32[144,128]{1,0:T(1,128)}', space=vmem, size = 0x12000, scoped, tag = 'internal scratch']
  %s0 = inlined_call_operand.vmem [shape: bf16[24,32], index: 0, kind: input, shape index: {}]
  %s1 = inlined_call_operand.vmem [shape: s32[24,1], index: 1, kind: input, shape index: {}]
  %s2 = inlined_call_operand.vmem [shape: f32[24,1], index: 2, kind: input, shape index: {}]
  %s3 = inlined_call_operand.hbm [shape: f32[2,8,128], index: 3, kind: output, shape index: {}]
  %s4 = sld [smem:[#allocation0]]
  $region45: #{tpu_custom_call.1} parent=0
    _
  %s6 = ssub.s32 1, %s4
  %s7 = scalar_select 0, %s6, %s4
  $region1: #{tpu_custom_call.1} parent=0
    #allocation2 [shape = 'u8[8192]{0}', space=vmem, size = 0x2000, scoped, tag = 'output window, operand 0']
    #allocation3 [shape = 's32[2]{0}', space=sflag, size = 0x8, scoped, tag = 'scoped memory for tpu_custom_call.1']
    %8 = vsyncpa [#allocation3], 0
    %s9 = scalar_lea.sflag [#allocation3], 1
    %10 = vsyncpa %s9, 0
    loop: start=0, step=1, limit=4
    $region2: #{tpu_custom_call.1} parent=1 // loop_pre_header
      _
    $region3: #{tpu_custom_call.1} parent=1 // loop_header
      %s12 = sphi 0, %s16
      %p13 = scmp.ge.s32.totalorder %s12, 4
      %s22 = sphi 0, %s24
      %s25 = sphi 0, %s22
      %s26 = sphi 0, %s25
      %s42 = sphi 0, %s26
      %s48 = sphi 0, %s50
      %s51 = sphi 0, %s48
      %s52 = sphi 0, %s51
      %s68 = sphi 0, %s52
      %s74 = sphi 0, %s76
      %s77 = sphi 0, %s74
      %s78 = sphi 0, %s77
      %s94 = sphi 0, %s78
      %s100 = sphi 0, %s102
      %s103 = sphi 0, %s100
      %s104 = sphi 0, %s103
      %s120 = sphi 0, %s104
    $region4: #{tpu_custom_call.1} parent=1 // loop_header_branch
      %15 = sbr.rel (%p13) target = $region8
    $region5: #{tpu_custom_call.1} parent=1 // loop_body
      %s17 = ssub.s32 %s12, 1
      %s18 = ssub.s32 %s12, 2
      %s19 = sadd.s32 %s12, 1
      %s20 = ssub.s32 %s12, %s19
      %p21 = scmp.eq.s32.totalorder %s20, 0
      %s23 = sadd.s32 %s22, 1
      %s24 = scalar_select %p21, %s22, %s23
      %p27 = pneg %p21
      %p28 = scmp.eq.s32.totalorder %s12, 1
      %p29 = por %p27, %p28
      %p30 = scmp.ne.s32.totalorder %s22, %s25
      %p31 = scmp.eq.s32.totalorder %s12, 0
      %p32 = por %p30, %p31
      %p33 = scmp.ne.s32.totalorder %s22, %s25
      %p34 = scmp.eq.s32.totalorder %s17, 1
      %p35 = por %p33, %p34
      %p36 = scmp.ne.s32.totalorder %s25, %s26
      %p37 = scmp.eq.s32.totalorder %s17, 0
      %p38 = por %p36, %p37
      %p39 = scmp.ne.s32.totalorder %s25, %s26
      %p40 = scmp.eq.s32.totalorder %s18, 1
      %p41 = por %p39, %p40
      %p43 = scmp.ne.s32.totalorder %s26, %s42
      %p44 = scmp.eq.s32.totalorder %s18, 0
      %p45 = por %p43, %p44
      %s46 = ssub.s32 %s12, %s19
      %p47 = scmp.eq.s32.totalorder %s46, 0
      %s49 = sadd.s32 %s48, 1
      %s50 = scalar_select %p47, %s48, %s49
      %p53 = pneg %p47
      %p54 = scmp.eq.s32.totalorder %s12, 1
      %p55 = por %p53, %p54
      %p56 = scmp.ne.s32.totalorder %s48, %s51
      %p57 = scmp.eq.s32.totalorder %s12, 0
      %p58 = por %p56, %p57
      %p59 = scmp.ne.s32.totalorder %s48, %s51
      %p60 = scmp.eq.s32.totalorder %s17, 1
      %p61 = por %p59, %p60
      %p62 = scmp.ne.s32.totalorder %s51, %s52
      %p63 = scmp.eq.s32.totalorder %s17, 0
      %p64 = por %p62, %p63
      %p65 = scmp.ne.s32.totalorder %s51, %s52
      %p66 = scmp.eq.s32.totalorder %s18, 1
      %p67 = por %p65, %p66
      %p69 = scmp.ne.s32.totalorder %s52, %s68
      %p70 = scmp.eq.s32.totalorder %s18, 0
      %p71 = por %p69, %p70
      %s72 = ssub.s32 %s12, %s19
      %p73 = scmp.eq.s32.totalorder %s72, 0
      %s75 = sadd.s32 %s74, 1
      %s76 = scalar_select %p73, %s74, %s75
      %p79 = pneg %p73
      %p80 = scmp.eq.s32.totalorder %s12, 1
      %p81 = por %p79, %p80
      %p82 = scmp.ne.s32.totalorder %s74, %s77
      %p83 = scmp.eq.s32.totalorder %s12, 0
      %p84 = por %p82, %p83
      %p85 = scmp.ne.s32.totalorder %s74, %s77
      %p86 = scmp.eq.s32.totalorder %s17, 1
      %p87 = por %p85, %p86
      %p88 = scmp.ne.s32.totalorder %s77, %s78
      %p89 = scmp.eq.s32.totalorder %s17, 0
      %p90 = por %p88, %p89
      %p91 = scmp.ne.s32.totalorder %s77, %s78
      %p92 = scmp.eq.s32.totalorder %s18, 1
      %p93 = por %p91, %p92
      %p95 = scmp.ne.s32.totalorder %s78, %s94
      %p96 = scmp.eq.s32.totalorder %s18, 0
      %p97 = por %p95, %p96
      %s98 = ssub.s32 %s12, %s19
      %p99 = scmp.eq.s32.totalorder %s98, 0
      %s101 = sadd.s32 %s100, 1
      %s102 = scalar_select %p99, %s100, %s101
      %p105 = pneg %p99
      %p106 = scmp.eq.s32.totalorder %s12, 1
      %p107 = por %p105, %p106
      %p108 = scmp.ne.s32.totalorder %s100, %s103
      %p109 = scmp.eq.s32.totalorder %s12, 0
      %p110 = por %p108, %p109
      %p111 = scmp.ne.s32.totalorder %s100, %s103
      %p112 = scmp.eq.s32.totalorder %s17, 1
      %p113 = por %p111, %p112
      %p114 = scmp.ne.s32.totalorder %s103, %s104
      %p115 = scmp.eq.s32.totalorder %s17, 0
      %p116 = por %p114, %p115
      %p117 = scmp.ne.s32.totalorder %s103, %s104
      %p118 = scmp.eq.s32.totalorder %s18, 1
      %p119 = por %p117, %p118
      %p121 = scmp.ne.s32.totalorder %s104, %s120
      %p122 = scmp.eq.s32.totalorder %s18, 0
      %p123 = por %p121, %p122
      %p124 = scmp.le.s32.totalorder 1, %s12
      %p125 = scmp.lt.s32.totalorder %s12, 3
      %p126 = pnand %p124, %p125
      %p127 = pneg %p126
      // Predicated region
      $region9: #{tpu_custom_call.1} parent=5 // pred_check
        _
      $region10: #{tpu_custom_call.1} parent=5 // pred_check_branch
        %129 = sbr.rel (%p126) target = $region12
      $region11: #{tpu_custom_call.1} parent=5 // pred_region
        %s130 = ssub.s32 %s12, 1
      $region12: #{tpu_custom_call.1} parent=5 // pred_fallthru
        _
      %p131 = scmp.lt.s32.totalorder %s12, 2
      // Predicated region
      $region13: #{tpu_custom_call.1} parent=5 // pred_check
        %p132 = pneg %p131
      $region14: #{tpu_custom_call.1} parent=5 // pred_check_branch
        %134 = sbr.rel (%p132) target = $region16
      $region15: #{tpu_custom_call.1} parent=5 // pred_region
        // Predicated region
        $region17: #{tpu_custom_call.1} parent=15 // pred_check
          %p135 = pneg %p32
        $region18: #{tpu_custom_call.1} parent=15 // pred_check_branch
          %137 = sbr.rel (%p135) target = $region20
        $region19: #{tpu_custom_call.1} parent=15 // pred_region
          %s138 = smul.u32 2, %s12
          %s139 = ssub.s32 3, %s138
          %p140 = scmp.lt.s32.totalorder %s139, 2
          %s141 = scalar_select %p140, %s139, 2
          %s142 = smul.u32 64, %s141
          %p143 = scmp.lt.s32.totalorder %s138, 2
          %s144 = scalar_select %p143, %s138, 2
          %s145 = smul.addr %s144, 4
          %s146 = scalar_lea.vmem %s0, %s145
          %s147 = smul.u32 2, %s12
          %s148 = ssub.s32 3, %s147
          %p149 = scmp.lt.s32.totalorder %s148, 2
          %s150 = scalar_select %p149, %s148, 2
          %s151 = smul.u32 64, %s150
        $region20: #{tpu_custom_call.1} parent=15 // pred_fallthru
          _
        // Predicated region
        $region21: #{tpu_custom_call.1} parent=15 // pred_check
          %p152 = pneg %p58
        $region22: #{tpu_custom_call.1} parent=15 // pred_check_branch
          %154 = sbr.rel (%p152) target = $region24
        $region23: #{tpu_custom_call.1} parent=15 // pred_region
          %s155 = smul.u32 2, %s12
          %s156 = ssub.s32 3, %s155
          %p157 = scmp.lt.s32.totalorder %s156, 2
          %s158 = scalar_select %p157, %s156, 2
          %s159 = smul.u32 128, %s158
          %p160 = scmp.lt.s32.totalorder %s155, 2
          %s161 = scalar_select %p160, %s155, 2
          %s162 = smul.addr %s161, 8
          %s163 = scalar_lea.vmem %s1, %s162
          %s164 = smul.u32 2, %s12
          %s165 = ssub.s32 3, %s164
          %p166 = scmp.lt.s32.totalorder %s165, 2
          %s167 = scalar_select %p166, %s165, 2
          %s168 = smul.u32 128, %s167
        $region24: #{tpu_custom_call.1} parent=15 // pred_fallthru
          _
        // Predicated region
        $region25: #{tpu_custom_call.1} parent=15 // pred_check
          %p169 = pneg %p84
        $region26: #{tpu_custom_call.1} parent=15 // pred_check_branch
          %171 = sbr.rel (%p169) target = $region28
        $region27: #{tpu_custom_call.1} parent=15 // pred_region
          %s172 = smul.u32 2, %s12
          %s173 = ssub.s32 3, %s172
          %p174 = scmp.lt.s32.totalorder %s173, 2
          %s175 = scalar_select %p174, %s173, 2
          %s176 = smul.u32 128, %s175
          %p177 = scmp.lt.s32.totalorder %s172, 2
          %s178 = scalar_select %p177, %s172, 2
          %s179 = smul.addr %s178, 8
          %s180 = scalar_lea.vmem %s2, %s179
          %s181 = smul.u32 2, %s12
          %s182 = ssub.s32 3, %s181
          %p183 = scmp.lt.s32.totalorder %s182, 2
          %s184 = scalar_select %p183, %s182, 2
          %s185 = smul.u32 128, %s184
        $region28: #{tpu_custom_call.1} parent=15 // pred_fallthru
          _
      $region16: #{tpu_custom_call.1} parent=5 // pred_fallthru
        _
      %p186 = scmp.le.s32.totalorder 1, %s12
      %p187 = scmp.lt.s32.totalorder %s12, 3
      %p188 = pnand %p186, %p187
      %p189 = pneg %p188
      // Predicated region
      $region29: #{tpu_custom_call.1} parent=5 // pred_check
        _
      $region30: #{tpu_custom_call.1} parent=5 // pred_check_branch
        %191 = sbr.rel (%p188) target = $region32
      $region31: #{tpu_custom_call.1} parent=5 // pred_region
        %s192 = ssub.s32 %s12, 1
        %s193 = smul.u32 2, %s17
        %s194 = ssub.s32 3, %s193
        %p195 = scmp.lt.s32.totalorder %s194, 2
        %s196 = scalar_select %p195, %s194, 2
        %s197 = smul.u32 64, %s196
        %p198 = scmp.lt.s32.totalorder %s193, 2
        %s199 = scalar_select %p198, %s193, 2
        %s200 = smul.addr %s199, 4
        %s201 = scalar_lea.vmem %s0, %s200
        %p202 = pneg %p38
        %p203 = pneg %p35
        %s204 = smul.u32 2, %s17
        %s205 = ssub.s32 3, %s204
        %p206 = scmp.lt.s32.totalorder %s205, 2
        %s207 = scalar_select %p206, %s205, 2
        %s208 = smul.u32 128, %s207
        %p209 = scmp.lt.s32.totalorder %s204, 2
        %s210 = scalar_select %p209, %s204, 2
        %s211 = smul.addr %s210, 8
        %s212 = scalar_lea.vmem %s1, %s211
        %p213 = pneg %p64
        %p214 = pneg %p61
        %s215 = smul.u32 2, %s17
        %s216 = ssub.s32 3, %s215
        %p217 = scmp.lt.s32.totalorder %s216, 2
        %s218 = scalar_select %p217, %s216, 2
        %s219 = smul.u32 128, %s218
        %p220 = scmp.lt.s32.totalorder %s215, 2
        %s221 = scalar_select %p220, %s215, 2
        %s222 = smul.addr %s221, 8
        %s223 = scalar_lea.vmem %s2, %s222
        %p224 = pneg %p90
        %p225 = pneg %p87
        %p226 = pneg %p116
        %p227 = pneg %p113
        %s228 = sand.u32 %s103, 1
        %s229 = scalar_lea.sflag [#allocation3], %s228
        %s230 = sand.u32 %s103, 1
        %s231 = smul.addr %s230, 8
        %s232 = scalar_lea.vmem [#allocation2], %s231
        %s233 = smul.u32 2, %s17
        %s234 = ssub.s32 3, %s233
        %p235 = scmp.lt.s32.totalorder %s234, 2
        %s236 = scalar_select %p235, %s234, 2
        %s237 = smul.u32 64, %s236
        %p238 = scmp.lt.s32.totalorder %s233, 2
        %s239 = scalar_select %p238, %s233, 2
        %s240 = smul.addr %s239, 4
        %s241 = scalar_lea.vmem %s0, %s240
        %s242 = smul.u32 2, %s17
        %s243 = ssub.s32 3, %s242
        %p244 = scmp.lt.s32.totalorder %s243, 2
        %s245 = scalar_select %p244, %s243, 2
        %s246 = smul.u32 64, %s245
        %s247 = smul.u32 2, %s17
        %s248 = ssub.s32 3, %s247
        %p249 = scmp.lt.s32.totalorder %s248, 2
        %s250 = scalar_select %p249, %s248, 2
        %s251 = smul.u32 128, %s250
        %p252 = scmp.lt.s32.totalorder %s247, 2
        %s253 = scalar_select %p252, %s247, 2
        %s254 = smul.addr %s253, 8
        %s255 = scalar_lea.vmem %s1, %s254
        %s256 = smul.u32 2, %s17
        %s257 = ssub.s32 3, %s256
        %p258 = scmp.lt.s32.totalorder %s257, 2
        %s259 = scalar_select %p258, %s257, 2
        %s260 = smul.u32 128, %s259
        %s261 = smul.u32 2, %s17
        %s262 = ssub.s32 3, %s261
        %p263 = scmp.lt.s32.totalorder %s262, 2
        %s264 = scalar_select %p263, %s262, 2
        %s265 = smul.u32 128, %s264
        %p266 = scmp.lt.s32.totalorder %s261, 2
        %s267 = scalar_select %p266, %s261, 2
        %s268 = smul.addr %s267, 8
        %s269 = scalar_lea.vmem %s2, %s268
        %s270 = smul.u32 2, %s17
        %s271 = ssub.s32 3, %s270
        %p272 = scmp.lt.s32.totalorder %s271, 2
        %s273 = scalar_select %p272, %s271, 2
        %s274 = smul.u32 128, %s273
        %v275 = vld [vmem:[%s241] sm:$0xf]
        %v276 = vld [vmem:[%s241 + $0x4] sm:$0xf]
        %v277 = vunpack.c.l.bf16 %v275
        %v278 = vunpack.c.l.bf16 %v276
        %v279 = vld [vmem:[%s255] sm:$0xff]
        %v280 = vld [vmem:[%s255 + $0x8] sm:$0xff]
        %v281 = vld [vmem:[%s269] sm:$0xff]
        %v282 = vld [vmem:[%s269 + $0x8] sm:$0xff]
        %v283 = vlaneseq
        %v284 = vshrl.u32 %v283, 7
        %v285 = vadd.s32 %v284, 8
        %s286 = smul.u32 %s17, 16
        %v287 = vstv %s286
        %v288 = vadd.s32 %v284, %v287
        %v289 = vadd.s32 %v285, %v287
        %vm290 = vcmp.lt.s32.totalorder %v288, 24
        %vm291 = vcmp.lt.s32.totalorder %v289, 24
        %vm292 = vcmask 261120
        %v293 = vsel %vm292, %v277, -inf
        %294 = vmax.xlane.f32.xlu0 %v293
        %v295 = vpop.xlane.xlu0 %294
        %v296 = vsel %vm292, %v278, -inf
        %297 = vmax.xlane.f32.xlu0 %v296
        %v298 = vpop.xlane.xlu0 %297
        %v299 = vsub.f32 %v277, %v295
        %v300 = vsub.f32 %v278, %v298
        %v301 = vlaneseq
        %v302 = vand.u32 %v301, 127
        %303 = vset.pattern.permute.xlu0 0
        %304 = vperm.xlu0 %303, %v279
        %v305 = vpop.permute.xlu0 %304
        %306 = vset.pattern.permute.xlu0 0
        %307 = vperm.xlu0 %306, %v280
        %v308 = vpop.permute.xlu0 %307
        %vm309 = vcmp.eq.s32.totalorder %v302, %v305
        %vm310 = vcmp.eq.s32.totalorder %v302, %v308
        %v311 = vsel %vm309, %v299, -inf
        %v312 = vsel %vm310, %v300, -inf
        %v313 = vsel %vm292, %v311, -inf
        %314 = vmax.xlane.f32.xlu0 %v313
        %v315 = vpop.xlane.xlu0 %314
        %v316 = vsel %vm292, %v312, -inf
        %317 = vmax.xlane.f32.xlu0 %v316
        %v318 = vpop.xlane.xlu0 %317
        %v319 = vmul.f32 %v299, 1.442695
        %v320 = vpow.pop %v319
        %v321 = vmul.f32 %v300, 1.442695
        %v322 = vpow.pop %v321
        %v323 = vsel %vm292, %v320, 0.0
        %324 = vadd.xlane.f32.xlu0 %v323
        %v325 = vpop.xlane.xlu0 %324
        %v326 = vsel %vm292, %v322, 0.0
        %327 = vadd.xlane.f32.xlu0 %v326
        %v328 = vpop.xlane.xlu0 %327
        %v329 = vlog2.pop %v325
        %v330 = vmul.f32 %v329, 0.6931472
        %v331 = vlog2.pop %v328
        %v332 = vmul.f32 %v331, 0.6931472
        %v333 = vsub.f32 %v315, %v330
        %v334 = vsub.f32 %v318, %v332
        %v335 = vmul.f32 %v333, 1.442695
        %v336 = vpow.pop %v335
        %v337 = vmul.f32 %v334, 1.442695
        %v338 = vpow.pop %v337
        %v339 = vsub.f32 1.0, %v336
        %v340 = vsub.f32 1.0, %v338
        %v341 = vmul.f32 %v281, -1.0
        %v342 = vmul.f32 %v282, -1.0
        %v343 = vmul.f32 %v341, %v339
        %v344 = vmul.f32 %v342, %v340
        %v345 = vmul.f32 %v343, %v333
        %v346 = vmul.f32 %v344, %v334
        %v347 = vsel %vm290, %v345, 0.0
        %v348 = vsel %vm291, %v346, 0.0
        %vm349 = vcmask 7168
        %v350 = vsel %vm349, %v347, 0.0
        %v351 = vsel %vm349, %v348, 0.0
        %v352 = vadd.f32 %v350, %v351
        %353 = vadd.xlane.f32.xlu0 %v352
        %v354 = vpop.xlane.xlu0 %353
        %v355 = vrot.slane %v354, 4
        %v356 = vadd.f32 %v354, %v355
        %v357 = vrot.slane %v356, 2
        %v358 = vadd.f32 %v356, %v357
        %v359 = vrot.slane %v358, 1
        %v360 = vadd.f32 %v358, %v359
        %s361 = vtos %v360
        %v362 = vstv %s361
        %363 = vst [vmem:[%s232] sm:$0xff] %v362
        %s364 = sand.u32 %s103, 1
        %s365 = scalar_lea.sflag [#allocation3], %s364
        %s366 = sand.u32 %s103, 1
        %s367 = smul.addr %s366, 8
        %s368 = scalar_lea.vmem [#allocation2], %s367
        // Predicated region
        $region33: #{tpu_custom_call.1} parent=31 // pred_check
          %p369 = pneg %p113
        $region34: #{tpu_custom_call.1} parent=31 // pred_check_branch
          %371 = sbr.rel (%p369) target = $region36
        $region35: #{tpu_custom_call.1} parent=31 // pred_region
          %s373 = ssub.s32 128, 128
          %374 = vsyncadd %s365, %s373
          %s375 = smul.addr %s17, 128
          %s376 = scalar_lea.hbm %s3, %s375
          %s378 = sshll.u32 %s368, 4
          %s379 = int_to_ptr.vmem [resolvable:$true] %s378
          %381 = dma.vmem_to_hbm [thread:$0]  %s379, 128, %s376, %s365
        $region36: #{tpu_custom_call.1} parent=31 // pred_fallthru
          _
      $region32: #{tpu_custom_call.1} parent=5 // pred_fallthru
        _
      %p382 = scmp.le.s32.totalorder 2, %s12
      // Predicated region
      $region37: #{tpu_custom_call.1} parent=5 // pred_check
        %p383 = pneg %p382
      $region38: #{tpu_custom_call.1} parent=5 // pred_check_branch
        %385 = sbr.rel (%p383) target = $region40
      $region39: #{tpu_custom_call.1} parent=5 // pred_region
        %s386 = ssub.s32 %s12, 2
        // Predicated region
        $region41: #{tpu_custom_call.1} parent=39 // pred_check
          %p387 = pneg %p119
        $region42: #{tpu_custom_call.1} parent=39 // pred_check_branch
          %389 = sbr.rel (%p387) target = $region44
        $region43: #{tpu_custom_call.1} parent=39 // pred_region
          %s390 = sand.u32 %s104, 1
          %s391 = scalar_lea.sflag [#allocation3], %s390
          %s392 = sand.u32 %s104, 1
          %s393 = smul.addr %s392, 8
          %s394 = scalar_lea.vmem [#allocation2], %s393
          %395 = dma.done %s391, 128
        $region44: #{tpu_custom_call.1} parent=39 // pred_fallthru
          _
      $region40: #{tpu_custom_call.1} parent=5 // pred_fallthru
        _
    $region6: #{tpu_custom_call.1} parent=1 // loop_footer
      %s16 = sadd.s32 1, %s12
    $region7: #{tpu_custom_call.1} parent=1 // loop_footer_branch
      %11 = sbr.rel target = $region3
    $region8: #{tpu_custom_call.1} parent=1 // loop_exit
      _
    %396 = vsyncpa [#allocation3], 1
    %s397 = scalar_lea.sflag [#allocation3], 1
    %398 = vsyncpa %s397, 1

</llo_original>
